<compile_context>
chip_gen: v7x
topology: tpu7x:2x2x1
jax: 0.10.0
libtpu: 0.0.40
codegen_flags: <defaults>
</compile_context>

<pallas_src>
import functools

import jax
import jax.numpy as jnp
from jax.experimental import pallas as pl
from jax.experimental.pallas import tpu as pltpu

_MIB = 1024 * 1024


# ---------------------------------------------------------------------------
# Hardware heuristics
# ---------------------------------------------------------------------------
def _hw_config():
    kind = ""
    try:
        kind = (jax.devices()[0].device_kind or "").lower()
    except Exception:
        pass
    if "v5 lite" in kind or "v5e" in kind or "v5lite" in kind:
        gen = "v5e"
    elif "v6" in kind:
        gen = "v6e"
    elif "v7" in kind or "7x" in kind:
        gen = "v7x"
    elif "v5" in kind:                       # v5p: 128 MiB VMEM, stay conservative on epilogue dtype
        gen = "v5e"
    else:
        gen = "unknown"

    if gen in ("v5e", "v6e"):
        return dict(gen=gen,
                    vmem_limit=100 * _MIB,
                    resident_weight_budget=80 * _MIB,
                    stream_row_budget=48 * _MIB,
                    stream_weight_budget=48 * _MIB,
                    bf16_exp=(gen == "v6e"),     # v5e has no bf16 VPU/EUP
                    mxu=128 if gen == "v5e" else 256)
    if gen == "v7x":
        return dict(gen=gen,
                    vmem_limit=48 * _MIB,        # 64 MiB physical, leave Mosaic headroom
                    resident_weight_budget=36 * _MIB,
                    stream_row_budget=20 * _MIB,
                    stream_weight_budget=20 * _MIB,
                    bf16_exp=True,
                    mxu=256)
    # Unknown / older chip: conservative budgets, f32 epilogue.
    return dict(gen=gen, vmem_limit=32 * _MIB, resident_weight_budget=16 * _MIB,
                stream_row_budget=12 * _MIB, stream_weight_budget=12 * _MIB,
                bf16_exp=False, mxu=128)


def _pick_block_b(B, D, row_budget_bytes):
    """Largest multiple-of-8 divisor of B whose f32 row tiles (+accumulators/temps,
    ~40 B per element) fit the given budget.  Bigger block_b => fewer weight
    (re)reads, which is the dominant HBM term."""
    if B <= 8 or B % 8 != 0:
        return B                               # full-dim block is always legal
    cap = max(8, min(B, row_budget_bytes // (40 * D)))
    best, bb = 8, 8
    while bb <= cap:
        if B % bb == 0:
            best = bb
        bb += 8
    return best


def _pick_block_k(D, itemsize, stream_budget_bytes, mxu):
    """Contraction tile for streaming the two [D, D] weights (2 ops x 2 pipeline
    buffers).  256-granularity on 256x256-MXU chips, 128 otherwise."""
    if D % 128 != 0:
        return D
    gran = 256 if (mxu >= 256 and D % 256 == 0) else 128
    best, bk = gran, gran
    while bk <= D:
        if D % bk == 0 and 4 * bk * D * itemsize <= stream_budget_bytes:
            best = bk
        bk += gran
    return best


# ---------------------------------------------------------------------------
# Shared softmax epilogue (traced inside the kernels; flags are static)
# ---------------------------------------------------------------------------
def _softmax(x, *, bf16_exp, approx_recip):
    m = jnp.max(x, axis=-1, keepdims=True)
    z = x - m
    if bf16_exp:
        e = jnp.exp(z.astype(jnp.bfloat16)).astype(jnp.float32)
    else:
        e = jnp.exp(z)
    s = jnp.sum(e, axis=-1, keepdims=True)
    if approx_recip:
        return e * pl.reciprocal(s, approx=True)    # EUP slot, effectively free
    return e / s


# ---------------------------------------------------------------------------
# Path A: weights resident in VMEM (single copy, loaded once)
# ---------------------------------------------------------------------------
def _resident_kernel(text_ref, image_ref, wt_hbm, bt_ref, wi_hbm, bi_ref,
                     out_ref, wt_vmem, wi_vmem, dma_sem,
                     *, bf16_exp, approx_recip):
    # Load both weights from HBM into single-buffered VMEM scratch once; the
    # scratch persists across all batch-tile grid steps ("arbitrary" axis).
    @pl.when(pl.program_id(0) == 0)
    def _load_weights():
        cp_t = pltpu.make_async_copy(wt_hbm, wt_vmem, dma_sem.at[0])
        cp_i = pltpu.make_async_copy(wi_hbm, wi_vmem, dma_sem.at[1])
        cp_t.start()
        cp_i.start()
        cp_t.wait()
        cp_i.wait()

    mm_dtype = wt_vmem.dtype
    t = text_ref[...]
    im = image_ref[...]

    logits_t = jnp.dot(t.astype(mm_dtype), wt_vmem[...],
                       preferred_element_type=jnp.float32) + bt_ref[...]
    logits_i = jnp.dot(im.astype(mm_dtype), wi_vmem[...],
                       preferred_element_type=jnp.float32) + bi_ref[...]

    fused = (_softmax(logits_t, bf16_exp=bf16_exp, approx_recip=approx_recip)
             * t.astype(jnp.float32)
             + _softmax(logits_i, bf16_exp=bf16_exp, approx_recip=approx_recip)
             * im.astype(jnp.float32))
    out_ref[...] = fused.astype(out_ref.dtype)


@functools.partial(jax.jit,
                   static_argnames=("block_b", "bf16_exp", "approx_recip",
                                    "vmem_limit_bytes"))
def _forward_resident(text, image, w_t, b_t, w_i, b_i, *,
                      block_b, bf16_exp, approx_recip, vmem_limit_bytes):
    B, D = text.shape
    n_b = B // block_b
    w_itemsize = jnp.dtype(w_t.dtype).itemsize

    cost = pl.CostEstimate(
        flops=4 * B * D * D,                       # two [B,D]x[D,D] matmuls
        transcendentals=2 * B * D,                 # two softmax exps
        bytes_accessed=2 * D * D * w_itemsize + 2 * D * 4 + 3 * B * D * 4,
    )

    kernel = functools.partial(_resident_kernel,
                               bf16_exp=bf16_exp, approx_recip=approx_recip)
    return pl.pallas_call(
        kernel,
        out_shape=jax.ShapeDtypeStruct((B, D), text.dtype),
        grid_spec=pltpu.PrefetchScalarGridSpec(
            num_scalar_prefetch=0,
            grid=(n_b,),
            in_specs=[
                pl.BlockSpec((block_b, D), lambda i: (i, 0)),   # text rows
                pl.BlockSpec((block_b, D), lambda i: (i, 0)),   # image rows
                pl.BlockSpec(memory_space=pl.ANY),              # W_t stays in HBM
                pl.BlockSpec((1, D), lambda i: (0, 0)),         # b_t
                pl.BlockSpec(memory_space=pl.ANY),              # W_i stays in HBM
                pl.BlockSpec((1, D), lambda i: (0, 0)),         # b_i
            ],
            out_specs=pl.BlockSpec((block_b, D), lambda i: (i, 0)),
            scratch_shapes=[
                pltpu.VMEM((D, D), w_t.dtype),                  # resident W_t
                pltpu.VMEM((D, D), w_i.dtype),                  # resident W_i
                pltpu.SemaphoreType.DMA((2,)),
            ],
        ),
        compiler_params=pltpu.CompilerParams(
            # Scratch weights carry state across batch tiles -> must be "arbitrary"
            # (megacore would give no win in this HBM-bound regime anyway).
            dimension_semantics=("arbitrary",),
            vmem_limit_bytes=vmem_limit_bytes),
        cost_estimate=cost,
    )(text, image, w_t, b_t, w_i, b_i)


# ---------------------------------------------------------------------------
# Path B: K-streaming (weights too large for VMEM residence)
# ---------------------------------------------------------------------------
def _streaming_kernel(text_ref, image_ref, wt_ref, bt_ref, wi_ref, bi_ref,
                      out_ref, acc_t_ref, acc_i_ref,
                      *, bf16_exp, approx_recip):
    block_k, D = wt_ref.shape
    mm_dtype = wt_ref.dtype
    k = pl.program_id(1)

    # Fold the bias into the accumulator init (saves a zeros store + epilogue add).
    @pl.when(k == 0)
    def _init():
        acc_t_ref[...] = jnp.broadcast_to(bt_ref[...], acc_t_ref.shape)
        acc_i_ref[...] = jnp.broadcast_to(bi_ref[...], acc_i_ref.shape)

    if block_k == D:
        t_k = text_ref[...]
        i_k = image_ref[...]
    else:
        start = pl.multiple_of(k * block_k, block_k)   # lane-aligned (block_k % 128 == 0)
        t_k = text_ref[:, pl.ds(start, block_k)]
        i_k = image_ref[:, pl.ds(start, block_k)]

    acc_t_ref[...] += jnp.dot(t_k.astype(mm_dtype), wt_ref[...],
                              preferred_element_type=jnp.float32)
    acc_i_ref[...] += jnp.dot(i_k.astype(mm_dtype), wi_ref[...],
                              preferred_element_type=jnp.float32)

    @pl.when(k == pl.num_programs(1) - 1)
    def _finalize():
        t = text_ref[...].astype(jnp.float32)
        im = image_ref[...].astype(jnp.float32)
        fused = (_softmax(acc_t_ref[...], bf16_exp=bf16_exp, approx_recip=approx_recip) * t
                 + _softmax(acc_i_ref[...], bf16_exp=bf16_exp, approx_recip=approx_recip) * im)
        out_ref[...] = fused.astype(out_ref.dtype)


@functools.partial(jax.jit,
                   static_argnames=("block_b", "block_k", "bf16_exp",
                                    "approx_recip", "vmem_limit_bytes"))
def _forward_streaming(text, image, w_t, b_t, w_i, b_i, *,
                       block_b, block_k, bf16_exp, approx_recip,
                       vmem_limit_bytes):
    B, D = text.shape
    n_b = B // block_b
    n_k = D // block_k
    w_itemsize = jnp.dtype(w_t.dtype).itemsize

    cost = pl.CostEstimate(
        flops=4 * B * D * D,
        transcendentals=2 * B * D,
        # Honest traffic: weights are re-streamed once per batch tile.
        bytes_accessed=n_b * 2 * D * D * w_itemsize + 2 * D * 4 + 3 * B * D * 4,
    )

    kernel = functools.partial(_streaming_kernel,
                               bf16_exp=bf16_exp, approx_recip=approx_recip)
    return pl.pallas_call(
        kernel,
        out_shape=jax.ShapeDtypeStruct((B, D), text.dtype),
        grid_spec=pltpu.PrefetchScalarGridSpec(
            num_scalar_prefetch=0,
            grid=(n_b, n_k),                         # reduction axis last
            in_specs=[
                pl.BlockSpec((block_b, D), lambda i, k: (i, 0)),
                pl.BlockSpec((block_b, D), lambda i, k: (i, 0)),
                pl.BlockSpec((block_k, D), lambda i, k: (k, 0)),
                pl.BlockSpec((1, D), lambda i, k: (0, 0)),
                pl.BlockSpec((block_k, D), lambda i, k: (k, 0)),
                pl.BlockSpec((1, D), lambda i, k: (0, 0)),
            ],
            out_specs=pl.BlockSpec((block_b, D), lambda i, k: (i, 0)),
            scratch_shapes=[pltpu.VMEM((block_b, D), jnp.float32),   # acc_t (logits)
                            pltpu.VMEM((block_b, D), jnp.float32)],  # acc_i (logits)
        ),
        compiler_params=pltpu.CompilerParams(
            dimension_semantics=("parallel", "arbitrary"),
            vmem_limit_bytes=vmem_limit_bytes),
        cost_estimate=cost,
    )(text, image, w_t, b_t, w_i, b_i)


# ---------------------------------------------------------------------------
# Public wrapper
# ---------------------------------------------------------------------------
def cross_modal_attention(text_features, image_features,
                          w_text, b_text, w_image, b_image,
                          *, block_b=None, block_k=None, weights_resident=None):
    """Pallas implementation of CrossModalAttention.forward.

    text_features, image_features: [B, D] float32
    w_text, w_image:               [D, D], pre-transposed (kernel does x @ W).
                                   Store them in bf16 for the fast path; the
                                   wrapper does NOT cast weights per call.
    b_text, b_image:               [D] or [1, D]
    """
    B, D = text_features.shape
    cfg = _hw_config()

    w_itemsize = jnp.dtype(w_text.dtype).itemsize
    precise = jnp.dtype(w_text.dtype) == jnp.float32
    bf16_exp = bool(cfg["bf16_exp"]) and not precise
    approx_recip = not precise

    # Biases are tiny; normalizing them eagerly per call is negligible.
    b_text = jnp.asarray(b_text).reshape(1, D).astype(jnp.float32)
    b_image = jnp.asarray(b_image).reshape(1, D).astype(jnp.float32)

    resident_w_bytes = 2 * D * D * w_itemsize
    if weights_resident is None:
        weights_resident = (
            block_k is None
            and resident_w_bytes <= cfg["resident_weight_budget"]
            and resident_w_bytes + 40 * 8 * D + 4 * _MIB <= cfg["vmem_limit"])

    if weights_resident:
        row_budget = cfg["vmem_limit"] - resident_w_bytes - 4 * _MIB
        if block_b is None:
            block_b = _pick_block_b(B, D, row_budget)
        assert B % block_b == 0
        assert block_b % 8 == 0 or block_b == B
        return _forward_resident(
            text_features, image_features, w_text, b_text, w_image, b_image,
            block_b=block_b, bf16_exp=bf16_exp, approx_recip=approx_recip,
            vmem_limit_bytes=int(cfg["vmem_limit"]))

    if block_k is None:
        block_k = _pick_block_k(D, w_itemsize, cfg["stream_weight_budget"], cfg["mxu"])
    if block_b is None:
        block_b = _pick_block_b(B, D, cfg["stream_row_budget"])
    assert B % block_b == 0
    assert block_b % 8 == 0 or block_b == B
    assert D % block_k == 0
    assert block_k == D or block_k % 128 == 0, \
        "block_k must be lane-aligned (multiple of 128) or the full D"
    return _forward_streaming(
        text_features, image_features, w_text, b_text, w_image, b_image,
        block_b=block_b, block_k=block_k, bf16_exp=bf16_exp,
        approx_recip=approx_recip, vmem_limit_bytes=int(cfg["vmem_limit"]))


# ---------------------------------------------------------------------------
# Pure-JAX reference (matches the PyTorch module semantics, f32)
# ---------------------------------------------------------------------------
def _reference(text, image, w_text, b_text, w_image, b_image):
    tw = jax.nn.softmax(text @ w_text + b_text, axis=-1)
    iw = jax.nn.softmax(image @ w_image + b_image, axis=-1)
    return tw * text + iw * image


if __name__ == "__main__":
    # Small shapes consistent with the module (default input_size=256).
    B, D = 8, 256

    key = jax.random.PRNGKey(0)
    k_text, k_image, k_wt, k_bt, k_wi, k_bi = jax.random.split(key, 6)

    text_features = jax.random.normal(k_text, (B, D), dtype=jnp.float32)
    image_features = jax.random.normal(k_image, (B, D), dtype=jnp.float32)

    # Linear(D, D) parameters, weights pre-transposed to [in, out].
    scale = 1.0 / jnp.sqrt(jnp.float32(D))
    w_text = (jax.random.uniform(k_wt, (D, D), dtype=jnp.float32) * 2 - 1) * scale
    b_text = (jax.random.uniform(k_bt, (1, D), dtype=jnp.float32) * 2 - 1) * scale
    w_image = (jax.random.uniform(k_wi, (D, D), dtype=jnp.float32) * 2 - 1) * scale
    b_image = (jax.random.uniform(k_bi, (1, D), dtype=jnp.float32) * 2 - 1) * scale

    ref = _reference(text_features, image_features,
                     w_text, b_text, w_image, b_image)

    # 1) Precise path: f32-stored weights, exact division softmax, weights-resident.
    out_f32 = jax.block_until_ready(cross_modal_attention(
        text_features, image_features, w_text, b_text, w_image, b_image))
    assert out_f32.shape == (B, D)
    assert jnp.allclose(out_f32, ref, atol=1e-3, rtol=1e-3), "f32 path mismatch"

    # 2) Fast path: weights stored in bf16 ONCE (outside the per-call path).
    w_text_bf16 = w_text.astype(jnp.bfloat16)
    w_image_bf16 = w_image.astype(jnp.bfloat16)
    out_bf16 = jax.block_until_ready(cross_modal_attention(
        text_features, image_features, w_text_bf16, b_text, w_image_bf16, b_image))
    assert jnp.allclose(out_bf16, ref, atol=1e-2, rtol=1e-2), "bf16 path mismatch"

    # 3) Force the K-streaming kernel (exercised here at small D for coverage;
    #    in production it is only chosen when the weights cannot be VMEM-resident).
    out_stream = jax.block_until_ready(cross_modal_attention(
        text_features, image_features, w_text_bf16, b_text, w_image_bf16, b_image,
        weights_resident=False, block_k=128))
    assert jnp.allclose(out_stream, ref, atol=1e-2, rtol=1e-2), "streaming path mismatch"

    print("KERNEL_OK")
</pallas_src>

<mosaic_0001>
module attributes {stable_mosaic.version = 11 : i64} {
  func.func @_resident_kernel(%arg0: i32, %arg1: memref<8x256xf32, #tpu.memory_space<vmem>>, %arg2: memref<8x256xf32, #tpu.memory_space<vmem>>, %arg3: memref<256x256xf32, #tpu.memory_space<any>>, %arg4: memref<1x256xf32, #tpu.memory_space<vmem>>, %arg5: memref<256x256xf32, #tpu.memory_space<any>>, %arg6: memref<1x256xf32, #tpu.memory_space<vmem>>, %arg7: memref<8x256xf32, #tpu.memory_space<vmem>>, %arg8: memref<256x256xf32, #tpu.memory_space<vmem>>, %arg9: memref<256x256xf32, #tpu.memory_space<vmem>>, %arg10: memref<2x!tpu.dma_semaphore, #tpu.memory_space<semaphore_mem>>) attributes {dimension_semantics = [#tpu.dimension_semantics<arbitrary>], iteration_bounds = array<i64: 1>, scalar_prefetch = 0 : i64, scratch_operands = 3 : i64, tpu.core_type = #tpu.core_type<tc>, window_params = [{transform_indices = @transform_0, window_bounds = array<i64: 8, 256>}, {transform_indices = @transform_1, window_bounds = array<i64: 8, 256>}, {}, {pipeline_mode = #tpu.pipeline_mode<synchronous>, transform_indices = @transform_3, window_bounds = array<i64: 1, 256>}, {}, {pipeline_mode = #tpu.pipeline_mode<synchronous>, transform_indices = @transform_5, window_bounds = array<i64: 1, 256>}, {transform_indices = @transform_6, window_bounds = array<i64: 8, 256>}]} {
    %c0_i32 = arith.constant 0 : i32
    %0 = arith.cmpi eq, %arg0, %c0_i32 : i32
    %1 = arith.extui %0 : i1 to i32
    %c0_i32_0 = arith.constant 0 : i32
    %2 = arith.cmpi ne, %1, %c0_i32_0 : i32
    scf.if %2 {
      %c0_i32_19 = arith.constant 0 : i32
      %37 = tpu.memref_slice %arg10[%c0_i32_19] : memref<2x!tpu.dma_semaphore, #tpu.memory_space<semaphore_mem>> -> memref<1x!tpu.dma_semaphore, #tpu.memory_space<semaphore_mem>>
      %38 = tpu.memref_squeeze %37 : memref<1x!tpu.dma_semaphore, #tpu.memory_space<semaphore_mem>> -> memref<!tpu.dma_semaphore, #tpu.memory_space<semaphore_mem>>
      tpu.enqueue_dma source(%arg3 : memref<256x256xf32, #tpu.memory_space<any>>) target(%arg8 : memref<256x256xf32, #tpu.memory_space<vmem>>) target_semaphore(%38 : memref<!tpu.dma_semaphore, #tpu.memory_space<semaphore_mem>>)
      %c1_i32 = arith.constant 1 : i32
      %39 = tpu.memref_slice %arg10[%c1_i32] : memref<2x!tpu.dma_semaphore, #tpu.memory_space<semaphore_mem>> -> memref<1x!tpu.dma_semaphore, #tpu.memory_space<semaphore_mem>>
      %40 = tpu.memref_squeeze %39 : memref<1x!tpu.dma_semaphore, #tpu.memory_space<semaphore_mem>> -> memref<!tpu.dma_semaphore, #tpu.memory_space<semaphore_mem>>
      tpu.enqueue_dma source(%arg5 : memref<256x256xf32, #tpu.memory_space<any>>) target(%arg9 : memref<256x256xf32, #tpu.memory_space<vmem>>) target_semaphore(%40 : memref<!tpu.dma_semaphore, #tpu.memory_space<semaphore_mem>>)
      %c0_i32_20 = arith.constant 0 : i32
      %41 = tpu.memref_slice %arg10[%c0_i32_20] : memref<2x!tpu.dma_semaphore, #tpu.memory_space<semaphore_mem>> -> memref<1x!tpu.dma_semaphore, #tpu.memory_space<semaphore_mem>>
      %42 = tpu.memref_squeeze %41 : memref<1x!tpu.dma_semaphore, #tpu.memory_space<semaphore_mem>> -> memref<!tpu.dma_semaphore, #tpu.memory_space<semaphore_mem>>
      tpu.wait_dma2 semaphore(%42 : memref<!tpu.dma_semaphore, #tpu.memory_space<semaphore_mem>>) src(%arg3 : memref<256x256xf32, #tpu.memory_space<any>>) dst(%arg8 : memref<256x256xf32, #tpu.memory_space<vmem>>)
      %c1_i32_21 = arith.constant 1 : i32
      %43 = tpu.memref_slice %arg10[%c1_i32_21] : memref<2x!tpu.dma_semaphore, #tpu.memory_space<semaphore_mem>> -> memref<1x!tpu.dma_semaphore, #tpu.memory_space<semaphore_mem>>
      %44 = tpu.memref_squeeze %43 : memref<1x!tpu.dma_semaphore, #tpu.memory_space<semaphore_mem>> -> memref<!tpu.dma_semaphore, #tpu.memory_space<semaphore_mem>>
      tpu.wait_dma2 semaphore(%44 : memref<!tpu.dma_semaphore, #tpu.memory_space<semaphore_mem>>) src(%arg5 : memref<256x256xf32, #tpu.memory_space<any>>) dst(%arg9 : memref<256x256xf32, #tpu.memory_space<vmem>>)
    } else {
    }
    %c0 = arith.constant 0 : index
    %c0_1 = arith.constant 0 : index
    %3 = vector.load %arg1[%c0, %c0_1] : memref<8x256xf32, #tpu.memory_space<vmem>>, vector<8x256xf32>
    %c0_2 = arith.constant 0 : index
    %c0_3 = arith.constant 0 : index
    %4 = vector.load %arg2[%c0_2, %c0_3] : memref<8x256xf32, #tpu.memory_space<vmem>>, vector<8x256xf32>
    %c0_4 = arith.constant 0 : index
    %c0_5 = arith.constant 0 : index
    %5 = vector.load %arg8[%c0_4, %c0_5] : memref<256x256xf32, #tpu.memory_space<vmem>>, vector<256x256xf32>
    %cst = arith.constant dense<0.000000e+00> : vector<8x256xf32>
    %6 = tpu.matmul %3, %5, %cst {dimension_numbers = #tpu.dot_dimension_numbers<[1], [0], [0], [1], [0, 0, 1, 1], [], []>} : vector<8x256xf32>, vector<256x256xf32>, vector<8x256xf32> -> vector<8x256xf32>
    %c0_6 = arith.constant 0 : index
    %c0_7 = arith.constant 0 : index
    %7 = vector.load %arg4[%c0_6, %c0_7] : memref<1x256xf32, #tpu.memory_space<vmem>>, vector<1x256xf32>
    %8 = vector.broadcast %7 : vector<1x256xf32> to vector<8x256xf32>
    %9 = arith.addf %6, %8 : vector<8x256xf32>
    %c0_8 = arith.constant 0 : index
    %c0_9 = arith.constant 0 : index
    %10 = vector.load %arg9[%c0_8, %c0_9] : memref<256x256xf32, #tpu.memory_space<vmem>>, vector<256x256xf32>
    %cst_10 = arith.constant dense<0.000000e+00> : vector<8x256xf32>
    %11 = tpu.matmul %4, %10, %cst_10 {dimension_numbers = #tpu.dot_dimension_numbers<[1], [0], [0], [1], [0, 0, 1, 1], [], []>} : vector<8x256xf32>, vector<256x256xf32>, vector<8x256xf32> -> vector<8x256xf32>
    %c0_11 = arith.constant 0 : index
    %c0_12 = arith.constant 0 : index
    %12 = vector.load %arg6[%c0_11, %c0_12] : memref<1x256xf32, #tpu.memory_space<vmem>>, vector<1x256xf32>
    %13 = vector.broadcast %12 : vector<1x256xf32> to vector<8x256xf32>
    %14 = arith.addf %11, %13 : vector<8x256xf32>
    %cst_13 = arith.constant dense<0xFF800000> : vector<8xf32>
    %15 = vector.multi_reduction <maximumf>, %9, %cst_13 [1] : vector<8x256xf32> to vector<8xf32>
    %16 = vector.shape_cast %15 : vector<8xf32> to vector<8x1xf32>
    %17 = vector.broadcast %16 : vector<8x1xf32> to vector<8x256xf32>
    %18 = arith.subf %9, %17 : vector<8x256xf32>
    %19 = math.exp %18 : vector<8x256xf32>
    %cst_14 = arith.constant dense<0.000000e+00> : vector<8xf32>
    %20 = vector.multi_reduction <add>, %19, %cst_14 [1] : vector<8x256xf32> to vector<8xf32>
    %21 = vector.shape_cast %20 : vector<8xf32> to vector<8x1xf32>
    %22 = vector.broadcast %21 : vector<8x1xf32> to vector<8x256xf32>
    %23 = arith.divf %19, %22 : vector<8x256xf32>
    %24 = arith.mulf %23, %3 : vector<8x256xf32>
    %cst_15 = arith.constant dense<0xFF800000> : vector<8xf32>
    %25 = vector.multi_reduction <maximumf>, %14, %cst_15 [1] : vector<8x256xf32> to vector<8xf32>
    %26 = vector.shape_cast %25 : vector<8xf32> to vector<8x1xf32>
    %27 = vector.broadcast %26 : vector<8x1xf32> to vector<8x256xf32>
    %28 = arith.subf %14, %27 : vector<8x256xf32>
    %29 = math.exp %28 : vector<8x256xf32>
    %cst_16 = arith.constant dense<0.000000e+00> : vector<8xf32>
    %30 = vector.multi_reduction <add>, %29, %cst_16 [1] : vector<8x256xf32> to vector<8xf32>
    %31 = vector.shape_cast %30 : vector<8xf32> to vector<8x1xf32>
    %32 = vector.broadcast %31 : vector<8x1xf32> to vector<8x256xf32>
    %33 = arith.divf %29, %32 : vector<8x256xf32>
    %34 = arith.mulf %33, %4 : vector<8x256xf32>
    %35 = arith.addf %24, %34 : vector<8x256xf32>
    %c0_17 = arith.constant 0 : index
    %c0_18 = arith.constant 0 : index
    %36 = vector.load %arg7[%c0_17, %c0_18] : memref<8x256xf32, #tpu.memory_space<vmem>>, vector<8x256xf32>
    tpu.vector_store %arg7[%c0_17, %c0_18], %35 {strides = array<i32>} : memref<8x256xf32, #tpu.memory_space<vmem>>, vector<8x256xf32>,
    return
  }
  func.func @transform_0(%arg0: i32) -> (i32, i32) {
    %c0_i32 = arith.constant 0 : i32
    %c0_i32_0 = arith.constant 0 : i32
    return %arg0, %c0_i32 : i32, i32
  }
  func.func @transform_1(%arg0: i32) -> (i32, i32) {
    %c0_i32 = arith.constant 0 : i32
    %c0_i32_0 = arith.constant 0 : i32
    return %arg0, %c0_i32 : i32, i32
  }
  func.func @transform_3(%arg0: i32) -> (i32, i32) {
    %c0_i32 = arith.constant 0 : i32
    %c0_i32_0 = arith.constant 0 : i32
    %c0_i32_1 = arith.constant 0 : i32
    return %c0_i32, %c0_i32_0 : i32, i32
  }
  func.func @transform_5(%arg0: i32) -> (i32, i32) {
    %c0_i32 = arith.constant 0 : i32
    %c0_i32_0 = arith.constant 0 : i32
    %c0_i32_1 = arith.constant 0 : i32
    return %c0_i32, %c0_i32_0 : i32, i32
  }
  func.func @transform_6(%arg0: i32) -> (i32, i32) {
    %c0_i32 = arith.constant 0 : i32
    %c0_i32_0 = arith.constant 0 : i32
    return %arg0, %c0_i32 : i32, i32
  }
}

</mosaic_0001>

<llo_original>
// kernel: _forward_resident.1
$region0: #{_forward_resident.1}
  #allocation0 [shape = 'u32[]', space=smem, size = 0x4, offset = 0x4, fixed_abs, tag = 'smem constant byte address 0x4 - core index']
  #allocation1 [shape = 'u32[144,128]{1,0:T(1,128)}', space=vmem, size = 0x12000, scoped, tag = 'internal scratch']
  #allocation2 [shape = 'f32[256,256]{1,0:T(8,128)}', space=vmem, size = 0x40000, scoped, tag = 'scratch operand']
  #allocation3 [shape = 'f32[256,256]{1,0:T(8,128)}', space=vmem, size = 0x40000, scoped, tag = 'scratch operand']
  #allocation4 [shape = 's32[2]{0}', space=sflag, size = 0x8, scoped, tag = 'scratch operand']
  #allocation11 [shape = 's32[]', space=sflag, size = 0x4, offset = 0, fixed_abs, tag = 'sflag constant byte address 0x0 - dummy sync flag']
  #allocation12 [shape = 's32[]', space=sflag, size = 0x4, offset = 0, fixed_abs, tag = 'sflag constant byte address 0x0 - dummy sync flag']
  #allocation13 [shape = 'u32[]', space=smem, size = 0x4, offset = 0x44, fixed_abs, tag = 'smem constant byte address 0x44 - assertion arg 0']
  #allocation14 [shape = 'u32[]', space=smem, size = 0x4, offset = 0x48, fixed_abs, tag = 'smem constant byte address 0x48 - assertion arg 1']
  #allocation15 [shape = 's32[]', space=sflag, size = 0x4, offset = 0, fixed_abs, tag = 'sflag constant byte address 0x0 - dummy sync flag']
  #allocation16 [shape = 's32[]', space=sflag, size = 0x4, offset = 0, fixed_abs, tag = 'sflag constant byte address 0x0 - dummy sync flag']
  %s0 = inlined_call_operand.hbm [shape: f32[8,256], index: 0, kind: input, shape index: {}]
  %s1 = inlined_call_operand.hbm [shape: f32[8,256], index: 1, kind: input, shape index: {}]
  %s2 = inlined_call_operand.hbm [shape: f32[256,256], index: 2, kind: input, shape index: {}]
  %s3 = inlined_call_operand.vmem [shape: f32[1,256], index: 3, kind: input, shape index: {}]
  %s4 = inlined_call_operand.hbm [shape: f32[256,256], index: 4, kind: input, shape index: {}]
  %s5 = inlined_call_operand.vmem [shape: f32[1,256], index: 5, kind: input, shape index: {}]
  %s6 = inlined_call_operand.hbm [shape: f32[8,256], index: 6, kind: output, shape index: {}]
  %s7 = sld [smem:[#allocation0]]
  $region46: #{_forward_resident.1} parent=0
    _
  %s9 = ssub.s32 1, %s7
  %s10 = scalar_select 0, %s9, %s7
  $region1: #{_forward_resident.1} parent=0
    #allocation5 [shape = 'u8[8192]{0}', space=vmem, size = 0x2000, scoped, tag = 'input window, operand 0, single buffered']
    #allocation6 [shape = 's32[1]{0}', space=sflag, size = 0x4, scoped, tag = 'scoped memory for _forward_resident.1']
    #allocation7 [shape = 's32[1]{0}', space=sflag, size = 0x4, scoped, tag = 'scoped memory for _forward_resident.1']
    #allocation8 [shape = 'u8[8192]{0}', space=vmem, size = 0x2000, scoped, tag = 'input window, operand 1, single buffered']
    #allocation9 [shape = 's32[1]{0}', space=sflag, size = 0x4, scoped, tag = 'scoped memory for _forward_resident.1']
    #allocation10 [shape = 'u8[8192]{0}', space=vmem, size = 0x2000, scoped, tag = 'output window, operand 0, single buffered']
    %11 = vsyncpa [#allocation6], 0
    %12 = vsyncpa [#allocation9], 0
    %13 = vsyncpa [#allocation7], 0
    // Predicated region
    $region2: #{_forward_resident.1} parent=1 // pred_check
      _
    $region3: #{_forward_resident.1} parent=1 // pred_check_branch
      %15 = sbr.rel (0) target = $region5
    $region4: #{_forward_resident.1} parent=1 // pred_region
      %s17 = ssub.s32 256, 256
      %18 = vsyncadd [#allocation6], %s17
      %s20 = sshll.u32 [#allocation5], 4
      %s21 = int_to_ptr.vmem [resolvable:$true] %s20
      %23 = dma.hbm_to_vmem [thread:$0]  %s0, 256, %s21, [#allocation6]
    $region5: #{_forward_resident.1} parent=1 // pred_fallthru
      _
    // Predicated region
    $region6: #{_forward_resident.1} parent=1 // pred_check
      _
    $region7: #{_forward_resident.1} parent=1 // pred_check_branch
      %25 = sbr.rel (0) target = $region9
    $region8: #{_forward_resident.1} parent=1 // pred_region
      %s27 = ssub.s32 256, 256
      %28 = vsyncadd [#allocation9], %s27
      %s30 = sshll.u32 [#allocation8], 4
      %s31 = int_to_ptr.vmem [resolvable:$true] %s30
      %33 = dma.hbm_to_vmem [thread:$0]  %s1, 256, %s31, [#allocation9]
    $region9: #{_forward_resident.1} parent=1 // pred_fallthru
      _
    // Predicated region
    $region10: #{_forward_resident.1} parent=1 // pred_check
      _
    $region11: #{_forward_resident.1} parent=1 // pred_check_branch
      %35 = sbr.rel (0) target = $region13
    $region12: #{_forward_resident.1} parent=1 // pred_region
      _
    $region13: #{_forward_resident.1} parent=1 // pred_fallthru
      _
    // Predicated region
    $region14: #{_forward_resident.1} parent=1 // pred_check
      _
    $region15: #{_forward_resident.1} parent=1 // pred_check_branch
      %37 = sbr.rel (0) target = $region17
    $region16: #{_forward_resident.1} parent=1 // pred_region
      _
    $region17: #{_forward_resident.1} parent=1 // pred_fallthru
      _
    // Predicated region
    $region18: #{_forward_resident.1} parent=1 // pred_check
      _
    $region19: #{_forward_resident.1} parent=1 // pred_check_branch
      %39 = sbr.rel (0) target = $region21
    $region20: #{_forward_resident.1} parent=1 // pred_region
      %40 = dma.done [#allocation6], 256
    $region21: #{_forward_resident.1} parent=1 // pred_fallthru
      _
    // Predicated region
    $region22: #{_forward_resident.1} parent=1 // pred_check
      _
    $region23: #{_forward_resident.1} parent=1 // pred_check_branch
      %42 = sbr.rel (0) target = $region25
    $region24: #{_forward_resident.1} parent=1 // pred_region
      %43 = dma.done [#allocation9], 256
    $region25: #{_forward_resident.1} parent=1 // pred_fallthru
      _
    %p44 = scmp.eq.s32.totalorder 0, 0
    // Predicated region
    $region26: #{_forward_resident.1} parent=1 // pred_check
      %p45 = pneg %p44
    $region27: #{_forward_resident.1} parent=1 // pred_check_branch
      %47 = sbr.rel (%p45) target = $region29
    $region28: #{_forward_resident.1} parent=1 // pred_region
      // Predicated region
      $region30: #{_forward_resident.1} parent=28 // pred_check
        _
      $region31: #{_forward_resident.1} parent=28 // pred_check_branch
        %49 = sbr.rel target = $region33
      $region32: #{_forward_resident.1} parent=28 // pred_region
        %50 = sst [smem:[#allocation13]] [#allocation12]
        %51 = sst [smem:[#allocation14]] [#allocation11]
      $region33: #{_forward_resident.1} parent=28 // pred_fallthru
        _
      %53 = shalt.err (0)
      %s55 = sshll.u32 [#allocation2], 4
      %s56 = int_to_ptr.vmem [resolvable:$true] %s55
      %58 = dma.hbm_to_vmem [thread:$0]  %s2, 8192, %s56, [#allocation4]
      %s59 = scalar_lea.sflag [#allocation4], 1
      // Predicated region
      $region34: #{_forward_resident.1} parent=28 // pred_check
        _
      $region35: #{_forward_resident.1} parent=28 // pred_check_branch
        %61 = sbr.rel target = $region37
      $region36: #{_forward_resident.1} parent=28 // pred_region
        %62 = sst [smem:[#allocation13]] [#allocation16]
        %63 = sst [smem:[#allocation14]] [#allocation15]
      $region37: #{_forward_resident.1} parent=28 // pred_fallthru
        _
      %65 = shalt.err (0)
      %s67 = sshll.u32 [#allocation3], 4
      %s68 = int_to_ptr.vmem [resolvable:$true] %s67
      %70 = dma.hbm_to_vmem [thread:$0]  %s4, 8192, %s68, %s59
      %s71 = smul.u32 8, 32
      %s72 = smul.u32 %s71, 2
      %s73 = sshll.u32 %s72, 4
      %74 = dma.done [#allocation4], %s73
      %s75 = sshll.u32 %s72, 4
      %76 = dma.done %s59, %s75
    $region29: #{_forward_resident.1} parent=1 // pred_fallthru
      _
    %v77 = vld [vmem:[#allocation5] sm:$0xff]
    %v78 = vld [vmem:[#allocation5 + $0x8] sm:$0xff]
    %v79 = vld [vmem:[#allocation8] sm:$0xff]
    %v80 = vld [vmem:[#allocation8 + $0x8] sm:$0xff]
    %v81 = vld [vmem:[#allocation2] sm:$0xff]
    %v82 = vld [vmem:[#allocation2 + $0x8] sm:$0xff]
    %v83 = vld [vmem:[#allocation2 + $0x10] sm:$0xff]
    %v84 = vld [vmem:[#allocation2 + $0x18] sm:$0xff]
    %v85 = vld [vmem:[#allocation2 + $0x20] sm:$0xff]
    %v86 = vld [vmem:[#allocation2 + $0x28] sm:$0xff]
    %v87 = vld [vmem:[#allocation2 + $0x30] sm:$0xff]
    %v88 = vld [vmem:[#allocation2 + $0x38] sm:$0xff]
    %v89 = vld [vmem:[#allocation2 + $0x40] sm:$0xff]
    %v90 = vld [vmem:[#allocation2 + $0x48] sm:$0xff]
    %v91 = vld [vmem:[#allocation2 + $0x50] sm:$0xff]
    %v92 = vld [vmem:[#allocation2 + $0x58] sm:$0xff]
    %v93 = vld [vmem:[#allocation2 + $0x60] sm:$0xff]
    %v94 = vld [vmem:[#allocation2 + $0x68] sm:$0xff]
    %v95 = vld [vmem:[#allocation2 + $0x70] sm:$0xff]
    %v96 = vld [vmem:[#allocation2 + $0x78] sm:$0xff]
    %v97 = vld [vmem:[#allocation2 + $0x80] sm:$0xff]
    %v98 = vld [vmem:[#allocation2 + $0x88] sm:$0xff]
    %v99 = vld [vmem:[#allocation2 + $0x90] sm:$0xff]
    %v100 = vld [vmem:[#allocation2 + $0x98] sm:$0xff]
    %v101 = vld [vmem:[#allocation2 + $0xa0] sm:$0xff]
    %v102 = vld [vmem:[#allocation2 + $0xa8] sm:$0xff]
    %v103 = vld [vmem:[#allocation2 + $0xb0] sm:$0xff]
    %v104 = vld [vmem:[#allocation2 + $0xb8] sm:$0xff]
    %v105 = vld [vmem:[#allocation2 + $0xc0] sm:$0xff]
    %v106 = vld [vmem:[#allocation2 + $0xc8] sm:$0xff]
    %v107 = vld [vmem:[#allocation2 + $0xd0] sm:$0xff]
    %v108 = vld [vmem:[#allocation2 + $0xd8] sm:$0xff]
    %v109 = vld [vmem:[#allocation2 + $0xe0] sm:$0xff]
    %v110 = vld [vmem:[#allocation2 + $0xe8] sm:$0xff]
    %v111 = vld [vmem:[#allocation2 + $0xf0] sm:$0xff]
    %v112 = vld [vmem:[#allocation2 + $0xf8] sm:$0xff]
    %v113 = vld [vmem:[#allocation2 + $0x100] sm:$0xff]
    %v114 = vld [vmem:[#allocation2 + $0x108] sm:$0xff]
    %v115 = vld [vmem:[#allocation2 + $0x110] sm:$0xff]
    %v116 = vld [vmem:[#allocation2 + $0x118] sm:$0xff]
    %v117 = vld [vmem:[#allocation2 + $0x120] sm:$0xff]
    %v118 = vld [vmem:[#allocation2 + $0x128] sm:$0xff]
    %v119 = vld [vmem:[#allocation2 + $0x130] sm:$0xff]
    %v120 = vld [vmem:[#allocation2 + $0x138] sm:$0xff]
    %v121 = vld [vmem:[#allocation2 + $0x140] sm:$0xff]
    %v122 = vld [vmem:[#allocation2 + $0x148] sm:$0xff]
    %v123 = vld [vmem:[#allocation2 + $0x150] sm:$0xff]
    %v124 = vld [vmem:[#allocation2 + $0x158] sm:$0xff]
    %v125 = vld [vmem:[#allocation2 + $0x160] sm:$0xff]
    %v126 = vld [vmem:[#allocation2 + $0x168] sm:$0xff]
    %v127 = vld [vmem:[#allocation2 + $0x170] sm:$0xff]
    %v128 = vld [vmem:[#allocation2 + $0x178] sm:$0xff]
    %v129 = vld [vmem:[#allocation2 + $0x180] sm:$0xff]
    %v130 = vld [vmem:[#allocation2 + $0x188] sm:$0xff]
    %v131 = vld [vmem:[#allocation2 + $0x190] sm:$0xff]
    %v132 = vld [vmem:[#allocation2 + $0x198] sm:$0xff]
    %v133 = vld [vmem:[#allocation2 + $0x1a0] sm:$0xff]
    %v134 = vld [vmem:[#allocation2 + $0x1a8] sm:$0xff]
    %v135 = vld [vmem:[#allocation2 + $0x1b0] sm:$0xff]
    %v136 = vld [vmem:[#allocation2 + $0x1b8] sm:$0xff]
    %v137 = vld [vmem:[#allocation2 + $0x1c0] sm:$0xff]
    %v138 = vld [vmem:[#allocation2 + $0x1c8] sm:$0xff]
    %v139 = vld [vmem:[#allocation2 + $0x1d0] sm:$0xff]
    %v140 = vld [vmem:[#allocation2 + $0x1d8] sm:$0xff]
    %v141 = vld [vmem:[#allocation2 + $0x1e0] sm:$0xff]
    %v142 = vld [vmem:[#allocation2 + $0x1e8] sm:$0xff]
    %v143 = vld [vmem:[#allocation2 + $0x1f0] sm:$0xff]
    %v144 = vld [vmem:[#allocation2 + $0x1f8] sm:$0xff]
    %v145 = vld [vmem:[%s3] sm:$0x3]
    %v147 = vlaneseq
    %v148 = vshrl.u32 %v147, 7
    %v149 = vsub.s32 0, %v148
    %v150 = vrot.slane %v145, %v149
    %v151 = vlaneseq
    %v152 = vshrl.u32 %v151, 7
    %v153 = vsub.s32 1, %v152
    %v154 = vrot.slane %v145, %v153
    %157 = vmatprep.subr.mxu0 %v82
    %158 = vmatpush1.msra.mxu0 %v81
    %159 = vmatprep.subr.mxu0 %v84
    %160 = vmatpush1.msra.mxu0 %v83
    %161 = vmatprep.subr.mxu0 %v86
    %162 = vmatpush1.msra.mxu0 %v85
    %163 = vmatprep.subr.mxu0 %v88
    %164 = vmatpush1.msra.mxu0 %v87
    %165 = vmatprep.subr.mxu0 %v90
    %166 = vmatpush1.msra.mxu0 %v89
    %167 = vmatprep.subr.mxu0 %v92
    %168 = vmatpush1.msra.mxu0 %v91
    %169 = vmatprep.subr.mxu0 %v94
    %170 = vmatpush1.msra.mxu0 %v93
    %171 = vmatprep.subr.mxu0 %v96
    %172 = vmatpush1.msra.mxu0 %v95
    %173 = vmatprep.subr.mxu0 %v98
    %174 = vmatpush1.msra.mxu0 %v97
    %175 = vmatprep.subr.mxu0 %v100
    %176 = vmatpush1.msra.mxu0 %v99
    %177 = vmatprep.subr.mxu0 %v102
    %178 = vmatpush1.msra.mxu0 %v101
    %179 = vmatprep.subr.mxu0 %v104
    %180 = vmatpush1.msra.mxu0 %v103
    %181 = vmatprep.subr.mxu0 %v106
    %182 = vmatpush1.msra.mxu0 %v105
    %183 = vmatprep.subr.mxu0 %v108
    %184 = vmatpush1.msra.mxu0 %v107
    %185 = vmatprep.subr.mxu0 %v110
    %186 = vmatpush1.msra.mxu0 %v109
    %187 = vmatprep.subr.mxu0 %v112
    %188 = vmatpush1.msra.mxu0 %v111
    %189 = vmatprep.subr.mxu0 %v114
    %190 = vmatpush1.msra.mxu0 %v113
    %191 = vmatprep.subr.mxu0 %v116
    %192 = vmatpush1.msra.mxu0 %v115
    %193 = vmatprep.subr.mxu0 %v118
    %194 = vmatpush1.msra.mxu0 %v117
    %195 = vmatprep.subr.mxu0 %v120
    %196 = vmatpush1.msra.mxu0 %v119
    %197 = vmatprep.subr.mxu0 %v122
    %198 = vmatpush1.msra.mxu0 %v121
    %199 = vmatprep.subr.mxu0 %v124
    %200 = vmatpush1.msra.mxu0 %v123
    %201 = vmatprep.subr.mxu0 %v126
    %202 = vmatpush1.msra.mxu0 %v125
    %203 = vmatprep.subr.mxu0 %v128
    %204 = vmatpush1.msra.mxu0 %v127
    %205 = vmatprep.subr.mxu0 %v130
    %206 = vmatpush1.msra.mxu0 %v129
    %207 = vmatprep.subr.mxu0 %v132
    %208 = vmatpush1.msra.mxu0 %v131
    %209 = vmatprep.subr.mxu0 %v134
    %210 = vmatpush1.msra.mxu0 %v133
    %211 = vmatprep.subr.mxu0 %v136
    %212 = vmatpush1.msra.mxu0 %v135
    %213 = vmatprep.subr.mxu0 %v138
    %214 = vmatpush1.msra.mxu0 %v137
    %215 = vmatprep.subr.mxu0 %v140
    %216 = vmatpush1.msra.mxu0 %v139
    %217 = vmatprep.subr.mxu0 %v142
    %218 = vmatpush1.msra.mxu0 %v141
    %219 = vmatprep.subr.mxu0 %v144
    %220 = vmatpush1.msra.mxu0 %v143
    %221 = vmatprep.mubr.f32.mxu0 %v78
    %222 = vmatmul.mubr.f32.gmra.mrb[0].mxu0 %v77
    %v223 = vpop.f32.mrb[0].mxu0
    %v224 = vadd.f32 %v150, %v223
    %v225 = vpop.f32.mrb[0].mxu0
    %v226 = vadd.f32 %v154, %v225
    %227 = vdwg.mxu0
    %v228 = vld [vmem:[#allocation3] sm:$0xff]
    %v229 = vld [vmem:[#allocation3 + $0x8] sm:$0xff]
    %v230 = vld [vmem:[#allocation3 + $0x10] sm:$0xff]
    %v231 = vld [vmem:[#allocation3 + $0x18] sm:$0xff]
    %v232 = vld [vmem:[#allocation3 + $0x20] sm:$0xff]
    %v233 = vld [vmem:[#allocation3 + $0x28] sm:$0xff]
    %v234 = vld [vmem:[#allocation3 + $0x30] sm:$0xff]
    %v235 = vld [vmem:[#allocation3 + $0x38] sm:$0xff]
    %v236 = vld [vmem:[#allocation3 + $0x40] sm:$0xff]
    %v237 = vld [vmem:[#allocation3 + $0x48] sm:$0xff]
    %v238 = vld [vmem:[#allocation3 + $0x50] sm:$0xff]
    %v239 = vld [vmem:[#allocation3 + $0x58] sm:$0xff]
    %v240 = vld [vmem:[#allocation3 + $0x60] sm:$0xff]
    %v241 = vld [vmem:[#allocation3 + $0x68] sm:$0xff]
    %v242 = vld [vmem:[#allocation3 + $0x70] sm:$0xff]
    %v243 = vld [vmem:[#allocation3 + $0x78] sm:$0xff]
    %v244 = vld [vmem:[#allocation3 + $0x80] sm:$0xff]
    %v245 = vld [vmem:[#allocation3 + $0x88] sm:$0xff]
    %v246 = vld [vmem:[#allocation3 + $0x90] sm:$0xff]
    %v247 = vld [vmem:[#allocation3 + $0x98] sm:$0xff]
    %v248 = vld [vmem:[#allocation3 + $0xa0] sm:$0xff]
    %v249 = vld [vmem:[#allocation3 + $0xa8] sm:$0xff]
    %v250 = vld [vmem:[#allocation3 + $0xb0] sm:$0xff]
    %v251 = vld [vmem:[#allocation3 + $0xb8] sm:$0xff]
    %v252 = vld [vmem:[#allocation3 + $0xc0] sm:$0xff]
    %v253 = vld [vmem:[#allocation3 + $0xc8] sm:$0xff]
    %v254 = vld [vmem:[#allocation3 + $0xd0] sm:$0xff]
    %v255 = vld [vmem:[#allocation3 + $0xd8] sm:$0xff]
    %v256 = vld [vmem:[#allocation3 + $0xe0] sm:$0xff]
    %v257 = vld [vmem:[#allocation3 + $0xe8] sm:$0xff]
    %v258 = vld [vmem:[#allocation3 + $0xf0] sm:$0xff]
    %v259 = vld [vmem:[#allocation3 + $0xf8] sm:$0xff]
    %v260 = vld [vmem:[#allocation3 + $0x100] sm:$0xff]
    %v261 = vld [vmem:[#allocation3 + $0x108] sm:$0xff]
    %v262 = vld [vmem:[#allocation3 + $0x110] sm:$0xff]
    %v263 = vld [vmem:[#allocation3 + $0x118] sm:$0xff]
    %v264 = vld [vmem:[#allocation3 + $0x120] sm:$0xff]
    %v265 = vld [vmem:[#allocation3 + $0x128] sm:$0xff]
    %v266 = vld [vmem:[#allocation3 + $0x130] sm:$0xff]
    %v267 = vld [vmem:[#allocation3 + $0x138] sm:$0xff]
    %v268 = vld [vmem:[#allocation3 + $0x140] sm:$0xff]
    %v269 = vld [vmem:[#allocation3 + $0x148] sm:$0xff]
    %v270 = vld [vmem:[#allocation3 + $0x150] sm:$0xff]
    %v271 = vld [vmem:[#allocation3 + $0x158] sm:$0xff]
    %v272 = vld [vmem:[#allocation3 + $0x160] sm:$0xff]
    %v273 = vld [vmem:[#allocation3 + $0x168] sm:$0xff]
    %v274 = vld [vmem:[#allocation3 + $0x170] sm:$0xff]
    %v275 = vld [vmem:[#allocation3 + $0x178] sm:$0xff]
    %v276 = vld [vmem:[#allocation3 + $0x180] sm:$0xff]
    %v277 = vld [vmem:[#allocation3 + $0x188] sm:$0xff]
    %v278 = vld [vmem:[#allocation3 + $0x190] sm:$0xff]
    %v279 = vld [vmem:[#allocation3 + $0x198] sm:$0xff]
    %v280 = vld [vmem:[#allocation3 + $0x1a0] sm:$0xff]
    %v281 = vld [vmem:[#allocation3 + $0x1a8] sm:$0xff]
    %v282 = vld [vmem:[#allocation3 + $0x1b0] sm:$0xff]
    %v283 = vld [vmem:[#allocation3 + $0x1b8] sm:$0xff]
    %v284 = vld [vmem:[#allocation3 + $0x1c0] sm:$0xff]
    %v285 = vld [vmem:[#allocation3 + $0x1c8] sm:$0xff]
    %v286 = vld [vmem:[#allocation3 + $0x1d0] sm:$0xff]
    %v287 = vld [vmem:[#allocation3 + $0x1d8] sm:$0xff]
    %v288 = vld [vmem:[#allocation3 + $0x1e0] sm:$0xff]
    %v289 = vld [vmem:[#allocation3 + $0x1e8] sm:$0xff]
    %v290 = vld [vmem:[#allocation3 + $0x1f0] sm:$0xff]
    %v291 = vld [vmem:[#allocation3 + $0x1f8] sm:$0xff]
    %v292 = vld [vmem:[%s5] sm:$0x3]
    %v294 = vlaneseq
    %v295 = vshrl.u32 %v294, 7
    %v296 = vsub.s32 0, %v295
    %v297 = vrot.slane %v292, %v296
    %v298 = vlaneseq
    %v299 = vshrl.u32 %v298, 7
    %v300 = vsub.s32 1, %v299
    %v301 = vrot.slane %v292, %v300
    %304 = vmatprep.subr.mxu0 %v229
    %305 = vmatpush1.msra.mxu0 %v228
    %306 = vmatprep.subr.mxu0 %v231
    %307 = vmatpush1.msra.mxu0 %v230
    %308 = vmatprep.subr.mxu0 %v233
    %309 = vmatpush1.msra.mxu0 %v232
    %310 = vmatprep.subr.mxu0 %v235
    %311 = vmatpush1.msra.mxu0 %v234
    %312 = vmatprep.subr.mxu0 %v237
    %313 = vmatpush1.msra.mxu0 %v236
    %314 = vmatprep.subr.mxu0 %v239
    %315 = vmatpush1.msra.mxu0 %v238
    %316 = vmatprep.subr.mxu0 %v241
    %317 = vmatpush1.msra.mxu0 %v240
    %318 = vmatprep.subr.mxu0 %v243
    %319 = vmatpush1.msra.mxu0 %v242
    %320 = vmatprep.subr.mxu0 %v245
    %321 = vmatpush1.msra.mxu0 %v244
    %322 = vmatprep.subr.mxu0 %v247
    %323 = vmatpush1.msra.mxu0 %v246
    %324 = vmatprep.subr.mxu0 %v249
    %325 = vmatpush1.msra.mxu0 %v248
    %326 = vmatprep.subr.mxu0 %v251
    %327 = vmatpush1.msra.mxu0 %v250
    %328 = vmatprep.subr.mxu0 %v253
    %329 = vmatpush1.msra.mxu0 %v252
    %330 = vmatprep.subr.mxu0 %v255
    %331 = vmatpush1.msra.mxu0 %v254
    %332 = vmatprep.subr.mxu0 %v257
    %333 = vmatpush1.msra.mxu0 %v256
    %334 = vmatprep.subr.mxu0 %v259
    %335 = vmatpush1.msra.mxu0 %v258
    %336 = vmatprep.subr.mxu0 %v261
    %337 = vmatpush1.msra.mxu0 %v260
    %338 = vmatprep.subr.mxu0 %v263
    %339 = vmatpush1.msra.mxu0 %v262
    %340 = vmatprep.subr.mxu0 %v265
    %341 = vmatpush1.msra.mxu0 %v264
    %342 = vmatprep.subr.mxu0 %v267
    %343 = vmatpush1.msra.mxu0 %v266
    %344 = vmatprep.subr.mxu0 %v269
    %345 = vmatpush1.msra.mxu0 %v268
    %346 = vmatprep.subr.mxu0 %v271
    %347 = vmatpush1.msra.mxu0 %v270
    %348 = vmatprep.subr.mxu0 %v273
    %349 = vmatpush1.msra.mxu0 %v272
    %350 = vmatprep.subr.mxu0 %v275
    %351 = vmatpush1.msra.mxu0 %v274
    %352 = vmatprep.subr.mxu0 %v277
    %353 = vmatpush1.msra.mxu0 %v276
    %354 = vmatprep.subr.mxu0 %v279
    %355 = vmatpush1.msra.mxu0 %v278
    %356 = vmatprep.subr.mxu0 %v281
    %357 = vmatpush1.msra.mxu0 %v280
    %358 = vmatprep.subr.mxu0 %v283
    %359 = vmatpush1.msra.mxu0 %v282
    %360 = vmatprep.subr.mxu0 %v285
    %361 = vmatpush1.msra.mxu0 %v284
    %362 = vmatprep.subr.mxu0 %v287
    %363 = vmatpush1.msra.mxu0 %v286
    %364 = vmatprep.subr.mxu0 %v289
    %365 = vmatpush1.msra.mxu0 %v288
    %366 = vmatprep.subr.mxu0 %v291
    %367 = vmatpush1.msra.mxu0 %v290
    %368 = vmatprep.mubr.f32.mxu0 %v80
    %369 = vmatmul.mubr.f32.gmra.mrb[0].mxu0 %v79
    %v370 = vpop.f32.mrb[0].mxu0
    %v371 = vadd.f32 %v297, %v370
    %v372 = vpop.f32.mrb[0].mxu0
    %v373 = vadd.f32 %v301, %v372
    %374 = vdwg.mxu0
    %v375 = vmax.f32 %v224, %v226
    %376 = vmax.xlane.f32.xlu0 %v375
    %v377 = vpop.xlane.xlu0 %376
    %v378 = vsub.f32 %v224, %v377
    %v379 = vsub.f32 %v226, %v377
    %v380 = vmul.f32 %v378, 1.442695
    %v381 = vpow.pop %v380
    %v382 = vmul.f32 %v379, 1.442695
    %v383 = vpow.pop %v382
    %v384 = vadd.f32 %v381, %v383
    %385 = vadd.xlane.f32.xlu0 %v384
    %v386 = vpop.xlane.xlu0 %385
    %v387 = vrcp.pop %v386
    %v388 = vmul.f32 %v381, %v387
    %v389 = vmul.f32 %v383, %v387
    %v390 = vmul.f32 %v388, %v77
    %v391 = vmul.f32 %v389, %v78
    %v392 = vmax.f32 %v371, %v373
    %393 = vmax.xlane.f32.xlu0 %v392
    %v394 = vpop.xlane.xlu0 %393
    %v395 = vsub.f32 %v371, %v394
    %v396 = vsub.f32 %v373, %v394
    %v397 = vmul.f32 %v395, 1.442695
    %v398 = vpow.pop %v397
    %v399 = vmul.f32 %v396, 1.442695
    %v400 = vpow.pop %v399
    %v401 = vadd.f32 %v398, %v400
    %402 = vadd.xlane.f32.xlu0 %v401
    %v403 = vpop.xlane.xlu0 %402
    %v404 = vrcp.pop %v403
    %v405 = vmul.f32 %v398, %v404
    %v406 = vmul.f32 %v400, %v404
    %v407 = vmul.f32 %v405, %v79
    %v408 = vmul.f32 %v406, %v80
    %v409 = vadd.f32 %v390, %v407
    %v410 = vadd.f32 %v391, %v408
    %411 = vst [vmem:[#allocation10] sm:$0xff] %v409
    %412 = vst [vmem:[#allocation10 + $0x8] sm:$0xff] %v410
    // Predicated region
    $region38: #{_forward_resident.1} parent=1 // pred_check
      _
    $region39: #{_forward_resident.1} parent=1 // pred_check_branch
      %414 = sbr.rel (0) target = $region41
    $region40: #{_forward_resident.1} parent=1 // pred_region
      %s416 = ssub.s32 256, 256
      %417 = vsyncadd [#allocation7], %s416
      %s419 = sshll.u32 [#allocation10], 4
      %s420 = int_to_ptr.vmem [resolvable:$true] %s419
      %422 = dma.vmem_to_hbm [thread:$0]  %s420, 256, %s6, [#allocation7]
    $region41: #{_forward_resident.1} parent=1 // pred_fallthru
      _
    // Predicated region
    $region42: #{_forward_resident.1} parent=1 // pred_check
      _
    $region43: #{_forward_resident.1} parent=1 // pred_check_branch
      %424 = sbr.rel (0) target = $region45
    $region44: #{_forward_resident.1} parent=1 // pred_region
      %425 = dma.done [#allocation7], 256
    $region45: #{_forward_resident.1} parent=1 // pred_fallthru
      _
    %426 = vsyncpa [#allocation6], 1
    %427 = vsyncpa [#allocation9], 1
    %428 = vsyncpa [#allocation7], 1
  %429 = vsyncmov [#allocation4]
  %s430 = vpop.sfrf %429
  %p431 = scmp.eq.s32.totalorder %s430, 0
  %p432 = pneg %p431
  %434 = shalt.err (%p432)
  %s435 = scalar_lea.sflag [#allocation4], 1
  %436 = vsyncmov %s435
  %s437 = vpop.sfrf %436
  %p438 = scmp.eq.s32.totalorder %s437, 0
  %p439 = pneg %p438
  %441 = shalt.err (%p439)

</llo_original>
